<compile_context>
chip_gen: v7x
topology: tpu7x:2x2x1
jax: 0.10.0
libtpu: 0.0.40
codegen_flags: <defaults>
</compile_context>

<pallas_src>
import jax
import jax.numpy as jnp
from jax.experimental import pallas as pl
from jax.experimental.pallas import tpu as pltpu


def _round_up(x, m):
    return (x + m - 1) // m * m


def qvaluenet_kernel(xa_ref, w1_ref, b1_ref, w2_ref, b2_ref, w3_ref, b3_ref,
                     out_ref):
    """Transposed (feature-major, batch-on-lane) 3-layer MLP forward.

    xa_ref : [n_in, TB]   compute dtype (bf16 or f32)
    w1_ref : [H, n_in]    w2_ref : [H, H]     w3_ref : [1, H]   (compute dtype)
    b1_ref : [H, 1]  f32  b2_ref : [H, 1] f32 b3_ref : [1, 1]   f32
    out_ref: [1, TB] f32  lane-dense output tile
    """
    dt = w1_ref.dtype
    # fc1: [H, n_in] @ [n_in, TB] -> [H, TB], f32 accumulation on the MXU.
    h = jnp.dot(w1_ref[...], xa_ref[...], preferred_element_type=jnp.float32)
    h = jnp.maximum(h + b1_ref[...], 0.0)          # bias + ReLU in f32 (VPU)
    # fc2: [H, H] @ [H, TB] -> [H, TB]
    h = jnp.dot(w2_ref[...], h.astype(dt), preferred_element_type=jnp.float32)
    h = jnp.maximum(h + b2_ref[...], 0.0)
    # fc3: lane-dense transposed form [1, H] @ [H, TB] -> [1, TB]
    out = jnp.dot(w3_ref[...], h.astype(dt), preferred_element_type=jnp.float32)
    out_ref[...] = (out + b3_ref[...]).astype(out_ref.dtype)


def _pick_batch_tile(B, n_in, H, itemsize, block_b, vmem_budget_bytes):
    """Largest lane-aligned batch tile that keeps double-buffered activations
    plus the resident weights comfortably inside the scoped-VMEM budget."""
    weights_bytes = (H * n_in + H * H + H) * itemsize + (2 * H + 2) * 4
    # Per batch column: xa (n_in, compute dtype) + hidden f32 temp (2*H) + out f32,
    # with xa and out double-buffered by the pipeline.
    per_col = 2 * n_in * itemsize + 2 * H * 4 + 2 * 4
    avail = max(vmem_budget_bytes - weights_bytes, per_col * 128)
    tb = max(128, min(block_b, (avail // per_col) // 128 * 128))
    return min(tb, _round_up(B, 128))


def qvalue_net_forward(x, a, params, *, compute_dtype=jnp.bfloat16,
                       block_b=2048):
    """Pallas forward of QValueNet.

    x: [B, n_states], a: [B, n_actions]; params in PyTorch nn.Linear layout
    (weights [out, in], biases [out]).  Returns [B, 1] float32.
    """
    w1, b1, w2, b2, w3, b3 = params
    B, n_states = x.shape
    n_actions = a.shape[1]
    n_in = n_states + n_actions
    H = w1.shape[0]

    itemsize = jnp.dtype(compute_dtype).itemsize
    vmem_limit = 32 * 1024 * 1024                   # safe on v5e/v6e/v7x
    TB = _pick_batch_tile(B, n_in, H, itemsize, block_b,
                          vmem_budget_bytes=vmem_limit - (8 << 20))
    Bp = _round_up(B, TB)
    n_tiles = Bp // TB

    # Layout plumbing (XLA side, once per call): pre-concat, transpose to
    # feature-major, pad the batch to a whole number of tiles.  This is pure
    # layout work that buys a lane-dense output slab inside the kernel.
    xa_t = jnp.concatenate([x, a], axis=1).T.astype(compute_dtype)  # [n_in, B]
    if Bp != B:
        xa_t = jnp.pad(xa_t, ((0, 0), (0, Bp - B)))

    w1c = w1.astype(compute_dtype)
    w2c = w2.astype(compute_dtype)
    w3c = w3.astype(compute_dtype)
    b1c = b1.reshape(H, 1).astype(jnp.float32)
    b2c = b2.reshape(H, 1).astype(jnp.float32)
    b3c = b3.reshape(1, 1).astype(jnp.float32)

    cost = pl.CostEstimate(
        flops=2 * Bp * (n_in * H + H * H + H),
        transcendentals=0,
        bytes_accessed=(Bp * n_in * itemsize          # activations in
                        + Bp * 4                      # output out
                        + (n_in * H + H * H + H) * itemsize
                        + (2 * H + 1) * 4),           # weights + biases
    )

    out_t = pl.pallas_call(
        qvaluenet_kernel,
        out_shape=jax.ShapeDtypeStruct((1, Bp), jnp.float32),
        grid=(n_tiles,),
        in_specs=[
            pl.BlockSpec((n_in, TB), lambda i: (0, i)),   # xa  (tiled on B)
            pl.BlockSpec((H, n_in), lambda i: (0, 0)),    # w1  (VMEM-resident)
            pl.BlockSpec((H, 1),    lambda i: (0, 0)),    # b1
            pl.BlockSpec((H, H),    lambda i: (0, 0)),    # w2
            pl.BlockSpec((H, 1),    lambda i: (0, 0)),    # b2
            pl.BlockSpec((1, H),    lambda i: (0, 0)),    # w3
            pl.BlockSpec((1, 1),    lambda i: (0, 0)),    # b3
        ],
        out_specs=pl.BlockSpec((1, TB), lambda i: (0, i)),
        compiler_params=pltpu.CompilerParams(
            dimension_semantics=("parallel",),            # 2 TCs on v7x
            vmem_limit_bytes=vmem_limit,
        ),
        cost_estimate=cost,
    )(xa_t, w1c, b1c, w2c, b2c, w3c, b3c)

    # Back to the PyTorch module's [B, 1] output shape.
    return out_t[:, :B].T


def init_params(key, n_states, n_hidden, n_actions):
    """Deterministic synthetic init in PyTorch nn.Linear layout ([out, in])."""
    ks = jax.random.split(key, 6)
    n_in = n_states + n_actions
    w1 = jax.random.normal(ks[0], (n_hidden, n_in), jnp.float32) * 0.1
    b1 = jax.random.normal(ks[1], (n_hidden,), jnp.float32) * 0.1
    w2 = jax.random.normal(ks[2], (n_hidden, n_hidden), jnp.float32) * 0.1
    b2 = jax.random.normal(ks[3], (n_hidden,), jnp.float32) * 0.1
    w3 = jax.random.normal(ks[4], (1, n_hidden), jnp.float32) * 0.1
    b3 = jax.random.normal(ks[5], (1,), jnp.float32) * 0.1
    return (w1, b1, w2, b2, w3, b3)


def reference_forward(x, a, params):
    """Pure-JAX reference mirroring the PyTorch module exactly (f32)."""
    w1, b1, w2, b2, w3, b3 = params
    cat = jnp.concatenate([x, a], axis=1)
    h = jax.nn.relu(cat @ w1.T + b1)
    h = jax.nn.relu(h @ w2.T + b2)
    return h @ w3.T + b3


if __name__ == "__main__":
    key = jax.random.PRNGKey(0)
    k_x, k_a, k_p = jax.random.split(key, 3)

    batch, n_states, n_actions, n_hidden = 2, 4, 2, 32
    x = jax.random.normal(k_x, (batch, n_states), jnp.float32)
    a = jax.random.normal(k_a, (batch, n_actions), jnp.float32)
    params = init_params(k_p, n_states, n_hidden, n_actions)

    ref = reference_forward(x, a, params)

    # f32 path: exact-math check.
    out_f32 = jax.block_until_ready(
        qvalue_net_forward(x, a, params, compute_dtype=jnp.float32))
    assert out_f32.shape == (batch, 1), out_f32.shape
    assert jnp.allclose(out_f32, ref, atol=1e-4, rtol=1e-4), (out_f32, ref)

    # bf16 MXU-operand path (default, halves HBM traffic): loose tolerance.
    out_bf16 = jax.block_until_ready(
        qvalue_net_forward(x, a, params, compute_dtype=jnp.bfloat16))
    assert out_bf16.shape == (batch, 1), out_bf16.shape
    assert jnp.allclose(out_bf16, ref, atol=2e-2, rtol=2e-2), (out_bf16, ref)

    # Larger, ragged batch to exercise multi-tile grid + padding path.
    k_x2, k_a2 = jax.random.split(jax.random.PRNGKey(1), 2)
    B2 = 300
    x2 = jax.random.normal(k_x2, (B2, n_states), jnp.float32)
    a2 = jax.random.normal(k_a2, (B2, n_actions), jnp.float32)
    ref2 = reference_forward(x2, a2, params)
    out2 = jax.block_until_ready(
        qvalue_net_forward(x2, a2, params, compute_dtype=jnp.float32,
                           block_b=128))
    assert out2.shape == (B2, 1), out2.shape
    assert jnp.allclose(out2, ref2, atol=1e-4, rtol=1e-4)

    print("KERNEL_OK")
</pallas_src>

<mosaic_0001>
module attributes {stable_mosaic.version = 11 : i64} {
  func.func @qvaluenet_kernel(%arg0: i32, %arg1: memref<6x128xf32, #tpu.memory_space<vmem>>, %arg2: memref<32x6xf32, #tpu.memory_space<vmem>>, %arg3: memref<32x1xf32, #tpu.memory_space<vmem>>, %arg4: memref<32x32xf32, #tpu.memory_space<vmem>>, %arg5: memref<32x1xf32, #tpu.memory_space<vmem>>, %arg6: memref<1x32xf32, #tpu.memory_space<vmem>>, %arg7: memref<1x1xf32, #tpu.memory_space<vmem>>, %arg8: memref<1x128xf32, #tpu.memory_space<vmem>>) attributes {dimension_semantics = [#tpu.dimension_semantics<parallel>], iteration_bounds = array<i64: 1>, scalar_prefetch = 0 : i64, scratch_operands = 0 : i64, tpu.core_type = #tpu.core_type<tc>, window_params = [{transform_indices = @transform_0, window_bounds = array<i64: 6, 128>}, {pipeline_mode = #tpu.pipeline_mode<synchronous>, transform_indices = @transform_1, window_bounds = array<i64: 32, 6>}, {pipeline_mode = #tpu.pipeline_mode<synchronous>, transform_indices = @transform_2, window_bounds = array<i64: 32, 1>}, {pipeline_mode = #tpu.pipeline_mode<synchronous>, transform_indices = @transform_3, window_bounds = array<i64: 32, 32>}, {pipeline_mode = #tpu.pipeline_mode<synchronous>, transform_indices = @transform_4, window_bounds = array<i64: 32, 1>}, {pipeline_mode = #tpu.pipeline_mode<synchronous>, transform_indices = @transform_5, window_bounds = array<i64: 1, 32>}, {pipeline_mode = #tpu.pipeline_mode<synchronous>, transform_indices = @transform_6, window_bounds = array<i64: 1, 1>}, {transform_indices = @transform_7, window_bounds = array<i64: 1, 128>}]} {
    %c0 = arith.constant 0 : index
    %c0_0 = arith.constant 0 : index
    %0 = vector.load %arg2[%c0, %c0_0] : memref<32x6xf32, #tpu.memory_space<vmem>>, vector<32x6xf32>
    %c0_1 = arith.constant 0 : index
    %c0_2 = arith.constant 0 : index
    %1 = vector.load %arg1[%c0_1, %c0_2] : memref<6x128xf32, #tpu.memory_space<vmem>>, vector<6x128xf32>
    %cst = arith.constant dense<0.000000e+00> : vector<32x128xf32>
    %2 = tpu.matmul %0, %1, %cst {dimension_numbers = #tpu.dot_dimension_numbers<[1], [0], [0], [1], [0, 0, 1, 1], [], []>} : vector<32x6xf32>, vector<6x128xf32>, vector<32x128xf32> -> vector<32x128xf32>
    %c0_3 = arith.constant 0 : index
    %c0_4 = arith.constant 0 : index
    %3 = vector.load %arg3[%c0_3, %c0_4] : memref<32x1xf32, #tpu.memory_space<vmem>>, vector<32x1xf32>
    %4 = vector.broadcast %3 : vector<32x1xf32> to vector<32x128xf32>
    %5 = arith.addf %2, %4 : vector<32x128xf32>
    %cst_5 = arith.constant 0.000000e+00 : f32
    %6 = vector.broadcast %cst_5 : f32 to vector<32x128xf32>
    %7 = arith.maximumf %5, %6 : vector<32x128xf32>
    %c0_6 = arith.constant 0 : index
    %c0_7 = arith.constant 0 : index
    %8 = vector.load %arg4[%c0_6, %c0_7] : memref<32x32xf32, #tpu.memory_space<vmem>>, vector<32x32xf32>
    %cst_8 = arith.constant dense<0.000000e+00> : vector<32x128xf32>
    %9 = tpu.matmul %8, %7, %cst_8 {dimension_numbers = #tpu.dot_dimension_numbers<[1], [0], [0], [1], [0, 0, 1, 1], [], []>} : vector<32x32xf32>, vector<32x128xf32>, vector<32x128xf32> -> vector<32x128xf32>
    %c0_9 = arith.constant 0 : index
    %c0_10 = arith.constant 0 : index
    %10 = vector.load %arg5[%c0_9, %c0_10] : memref<32x1xf32, #tpu.memory_space<vmem>>, vector<32x1xf32>
    %11 = vector.broadcast %10 : vector<32x1xf32> to vector<32x128xf32>
    %12 = arith.addf %9, %11 : vector<32x128xf32>
    %cst_11 = arith.constant 0.000000e+00 : f32
    %13 = vector.broadcast %cst_11 : f32 to vector<32x128xf32>
    %14 = arith.maximumf %12, %13 : vector<32x128xf32>
    %c0_12 = arith.constant 0 : index
    %c0_13 = arith.constant 0 : index
    %15 = vector.load %arg6[%c0_12, %c0_13] : memref<1x32xf32, #tpu.memory_space<vmem>>, vector<1x32xf32>
    %cst_14 = arith.constant dense<0.000000e+00> : vector<1x128xf32>
    %16 = tpu.matmul %15, %14, %cst_14 {dimension_numbers = #tpu.dot_dimension_numbers<[1], [0], [0], [1], [0, 0, 1, 1], [], []>} : vector<1x32xf32>, vector<32x128xf32>, vector<1x128xf32> -> vector<1x128xf32>
    %c0_15 = arith.constant 0 : index
    %c0_16 = arith.constant 0 : index
    %17 = vector.load %arg7[%c0_15, %c0_16] : memref<1x1xf32, #tpu.memory_space<vmem>>, vector<1x1xf32>
    %18 = vector.broadcast %17 : vector<1x1xf32> to vector<1x128xf32>
    %19 = arith.addf %16, %18 : vector<1x128xf32>
    %c0_17 = arith.constant 0 : index
    %c0_18 = arith.constant 0 : index
    %20 = vector.load %arg8[%c0_17, %c0_18] : memref<1x128xf32, #tpu.memory_space<vmem>>, vector<1x128xf32>
    tpu.vector_store %arg8[%c0_17, %c0_18], %19 {strides = array<i32>} : memref<1x128xf32, #tpu.memory_space<vmem>>, vector<1x128xf32>,
    return
  }
  func.func @transform_0(%arg0: i32) -> (i32, i32) {
    %c0_i32 = arith.constant 0 : i32
    %c0_i32_0 = arith.constant 0 : i32
    return %c0_i32, %arg0 : i32, i32
  }
  func.func @transform_1(%arg0: i32) -> (i32, i32) {
    %c0_i32 = arith.constant 0 : i32
    %c0_i32_0 = arith.constant 0 : i32
    %c0_i32_1 = arith.constant 0 : i32
    return %c0_i32, %c0_i32_0 : i32, i32
  }
  func.func @transform_2(%arg0: i32) -> (i32, i32) {
    %c0_i32 = arith.constant 0 : i32
    %c0_i32_0 = arith.constant 0 : i32
    %c0_i32_1 = arith.constant 0 : i32
    return %c0_i32, %c0_i32_0 : i32, i32
  }
  func.func @transform_3(%arg0: i32) -> (i32, i32) {
    %c0_i32 = arith.constant 0 : i32
    %c0_i32_0 = arith.constant 0 : i32
    %c0_i32_1 = arith.constant 0 : i32
    return %c0_i32, %c0_i32_0 : i32, i32
  }
  func.func @transform_4(%arg0: i32) -> (i32, i32) {
    %c0_i32 = arith.constant 0 : i32
    %c0_i32_0 = arith.constant 0 : i32
    %c0_i32_1 = arith.constant 0 : i32
    return %c0_i32, %c0_i32_0 : i32, i32
  }
  func.func @transform_5(%arg0: i32) -> (i32, i32) {
    %c0_i32 = arith.constant 0 : i32
    %c0_i32_0 = arith.constant 0 : i32
    %c0_i32_1 = arith.constant 0 : i32
    return %c0_i32, %c0_i32_0 : i32, i32
  }
  func.func @transform_6(%arg0: i32) -> (i32, i32) {
    %c0_i32 = arith.constant 0 : i32
    %c0_i32_0 = arith.constant 0 : i32
    %c0_i32_1 = arith.constant 0 : i32
    return %c0_i32, %c0_i32_0 : i32, i32
  }
  func.func @transform_7(%arg0: i32) -> (i32, i32) {
    %c0_i32 = arith.constant 0 : i32
    %c0_i32_0 = arith.constant 0 : i32
    return %c0_i32, %arg0 : i32, i32
  }
}

</mosaic_0001>

<llo_original>
// kernel: tpu_custom_call.1
$region0: #{tpu_custom_call.1}
  #allocation0 [shape = 'u32[]', space=smem, size = 0x4, offset = 0x4, fixed_abs, tag = 'smem constant byte address 0x4 - core index']
  #allocation1 [shape = 'u32[144,128]{1,0:T(1,128)}', space=vmem, size = 0x12000, scoped, tag = 'internal scratch']
  #allocation2 [shape = 'f32[1,1]{1,0:T(1,128)S(1)}', space=vmem, size = 0x200, scoped, tag = 'scoped memory for tpu_custom_call.1']
  %s0 = inlined_call_operand.vmem [shape: f32[6,128], index: 0, kind: input, shape index: {}]
  %s1 = inlined_call_operand.vmem [shape: f32[32,6], index: 1, kind: input, shape index: {}]
  %s2 = inlined_call_operand.vmem [shape: f32[32,1], index: 2, kind: input, shape index: {}]
  %s3 = inlined_call_operand.vmem [shape: f32[32,32], index: 3, kind: input, shape index: {}]
  %s4 = inlined_call_operand.vmem [shape: f32[32,1], index: 4, kind: input, shape index: {}]
  %s5 = inlined_call_operand.vmem [shape: f32[1,32], index: 5, kind: input, shape index: {}]
  %s6 = inlined_call_operand.<no memory space> [shape: f32[1,1], index: 6, kind: input, shape index: {}]
  %s7 = inlined_call_operand.hbm [shape: f32[1,128], index: 7, kind: output, shape index: {}]
  %s8 = sld [smem:[#allocation0]]
  $region38: #{tpu_custom_call.1} parent=0
    _
  %s10 = ssub.s32 1, %s8
  %s11 = scalar_select 0, %s10, %s8
  %v12 = vstv %s6
  %13 = vst [vmem:[#allocation2] sm:$0x1] %v12
  $region1: #{tpu_custom_call.1} parent=0
    #allocation3 [shape = 'u8[512]{0}', space=vmem, size = 0x400, scoped, tag = 'output window, operand 0, single buffered']
    #allocation4 [shape = 's32[1]{0}', space=sflag, size = 0x4, scoped, tag = 'scoped memory for tpu_custom_call.1']
    %14 = vsyncpa [#allocation4], 0
    // Predicated region
    $region2: #{tpu_custom_call.1} parent=1 // pred_check
      _
    $region3: #{tpu_custom_call.1} parent=1 // pred_check_branch
      %16 = sbr.rel (0) target = $region5
    $region4: #{tpu_custom_call.1} parent=1 // pred_region
      _
    $region5: #{tpu_custom_call.1} parent=1 // pred_fallthru
      _
    // Predicated region
    $region6: #{tpu_custom_call.1} parent=1 // pred_check
      _
    $region7: #{tpu_custom_call.1} parent=1 // pred_check_branch
      %18 = sbr.rel (0) target = $region9
    $region8: #{tpu_custom_call.1} parent=1 // pred_region
      _
    $region9: #{tpu_custom_call.1} parent=1 // pred_fallthru
      _
    // Predicated region
    $region10: #{tpu_custom_call.1} parent=1 // pred_check
      _
    $region11: #{tpu_custom_call.1} parent=1 // pred_check_branch
      %20 = sbr.rel (0) target = $region13
    $region12: #{tpu_custom_call.1} parent=1 // pred_region
      _
    $region13: #{tpu_custom_call.1} parent=1 // pred_fallthru
      _
    // Predicated region
    $region14: #{tpu_custom_call.1} parent=1 // pred_check
      _
    $region15: #{tpu_custom_call.1} parent=1 // pred_check_branch
      %22 = sbr.rel (0) target = $region17
    $region16: #{tpu_custom_call.1} parent=1 // pred_region
      _
    $region17: #{tpu_custom_call.1} parent=1 // pred_fallthru
      _
    // Predicated region
    $region18: #{tpu_custom_call.1} parent=1 // pred_check
      _
    $region19: #{tpu_custom_call.1} parent=1 // pred_check_branch
      %24 = sbr.rel (0) target = $region21
    $region20: #{tpu_custom_call.1} parent=1 // pred_region
      _
    $region21: #{tpu_custom_call.1} parent=1 // pred_fallthru
      _
    // Predicated region
    $region22: #{tpu_custom_call.1} parent=1 // pred_check
      _
    $region23: #{tpu_custom_call.1} parent=1 // pred_check_branch
      %26 = sbr.rel (0) target = $region25
    $region24: #{tpu_custom_call.1} parent=1 // pred_region
      _
    $region25: #{tpu_custom_call.1} parent=1 // pred_fallthru
      _
    // Predicated region
    $region26: #{tpu_custom_call.1} parent=1 // pred_check
      _
    $region27: #{tpu_custom_call.1} parent=1 // pred_check_branch
      %28 = sbr.rel (0) target = $region29
    $region28: #{tpu_custom_call.1} parent=1 // pred_region
      _
    $region29: #{tpu_custom_call.1} parent=1 // pred_fallthru
      _
    %v29 = vld [vmem:[%s1] sm:$0xff]
    %v30 = vld [vmem:[%s1 + $0x8] sm:$0xff]
    %v31 = vld [vmem:[%s1 + $0x10] sm:$0xff]
    %v32 = vld [vmem:[%s1 + $0x18] sm:$0xff]
    %v33 = vld [vmem:[%s0] sm:$0x3f]
    %v34 = vld [vmem:[%s2] sm:$0xff]
    %v35 = vld [vmem:[%s2 + $0x8] sm:$0xff]
    %v36 = vld [vmem:[%s2 + $0x10] sm:$0xff]
    %v37 = vld [vmem:[%s2 + $0x18] sm:$0xff]
    %39 = vset.pattern.permute.xlu0 0
    %40 = vperm.xlu0 %39, %v34
    %v41 = vpop.permute.xlu0 %40
    %44 = vset.pattern.permute.xlu0 0
    %45 = vperm.xlu0 %44, %v35
    %v46 = vpop.permute.xlu0 %45
    %49 = vset.pattern.permute.xlu0 0
    %50 = vperm.xlu0 %49, %v36
    %v51 = vpop.permute.xlu0 %50
    %54 = vset.pattern.permute.xlu0 0
    %55 = vperm.xlu0 %54, %v37
    %v56 = vpop.permute.xlu0 %55
    %vm58 = vcmask 48128
    %v60 = vsel %vm58, %v29, 0
    %v63 = vsel %vm58, %v30, 0
    %v66 = vsel %vm58, %v31, 0
    %v69 = vsel %vm58, %v32, 0
    %vm71 = vcmask 1045504
    %v73 = vsel %vm71, %v33, 0
    %75 = vmatprep.subr.mxu0 0.0
    %76 = vmatpush1.msra.mxu0 %v73
    %77 = vmatprep.subr.mxu0 0.0
    %78 = vmatpush1.msra.mxu0 0.0
    %79 = vmatprep.subr.mxu0 0.0
    %80 = vmatpush1.msra.mxu0 0.0
    %81 = vmatprep.subr.mxu0 0.0
    %82 = vmatpush1.msra.mxu0 0.0
    %83 = vmatprep.subr.mxu0 0.0
    %84 = vmatpush1.msra.mxu0 0.0
    %85 = vmatprep.subr.mxu0 0.0
    %86 = vmatpush1.msra.mxu0 0.0
    %87 = vmatprep.subr.mxu0 0.0
    %88 = vmatpush1.msra.mxu0 0.0
    %89 = vmatprep.subr.mxu0 0.0
    %90 = vmatpush1.msra.mxu0 0.0
    %91 = vmatprep.subr.mxu0 0.0
    %92 = vmatpush1.msra.mxu0 0.0
    %93 = vmatprep.subr.mxu0 0.0
    %94 = vmatpush1.msra.mxu0 0.0
    %95 = vmatprep.subr.mxu0 0.0
    %96 = vmatpush1.msra.mxu0 0.0
    %97 = vmatprep.subr.mxu0 0.0
    %98 = vmatpush1.msra.mxu0 0.0
    %99 = vmatprep.subr.mxu0 0.0
    %100 = vmatpush1.msra.mxu0 0.0
    %101 = vmatprep.subr.mxu0 0.0
    %102 = vmatpush1.msra.mxu0 0.0
    %103 = vmatprep.subr.mxu0 0.0
    %104 = vmatpush1.msra.mxu0 0.0
    %105 = vmatprep.subr.mxu0 0.0
    %106 = vmatpush1.msra.mxu0 0.0
    %107 = vmatprep.subr.mxu0 0.0
    %108 = vmatpush1.msra.mxu0 0.0
    %109 = vmatprep.subr.mxu0 0.0
    %110 = vmatpush1.msra.mxu0 0.0
    %111 = vmatprep.subr.mxu0 0.0
    %112 = vmatpush1.msra.mxu0 0.0
    %113 = vmatprep.subr.mxu0 0.0
    %114 = vmatpush1.msra.mxu0 0.0
    %115 = vmatprep.subr.mxu0 0.0
    %116 = vmatpush1.msra.mxu0 0.0
    %117 = vmatprep.subr.mxu0 0.0
    %118 = vmatpush1.msra.mxu0 0.0
    %119 = vmatprep.subr.mxu0 0.0
    %120 = vmatpush1.msra.mxu0 0.0
    %121 = vmatprep.subr.mxu0 0.0
    %122 = vmatpush1.msra.mxu0 0.0
    %123 = vmatprep.subr.mxu0 0.0
    %124 = vmatpush1.msra.mxu0 0.0
    %125 = vmatprep.subr.mxu0 0.0
    %126 = vmatpush1.msra.mxu0 0.0
    %127 = vmatprep.subr.mxu0 0.0
    %128 = vmatpush1.msra.mxu0 0.0
    %129 = vmatprep.subr.mxu0 0.0
    %130 = vmatpush1.msra.mxu0 0.0
    %131 = vmatprep.subr.mxu0 0.0
    %132 = vmatpush1.msra.mxu0 0.0
    %133 = vmatprep.subr.mxu0 0.0
    %134 = vmatpush1.msra.mxu0 0.0
    %135 = vmatprep.subr.mxu0 0.0
    %136 = vmatpush1.msra.mxu0 0.0
    %137 = vmatprep.subr.mxu0 0.0
    %138 = vmatpush1.msra.mxu0 0.0
    %139 = vmatprep.mubr.f32.mxu0 0.0
    %140 = vmatmul.mubr.f32.gmra.mrb[0].mxu0 %v60
    %v141 = vpop.f32.mrb[0].mxu0
    %v142 = vadd.f32 %v41, %v141
    %v143 = vpop.f32.mrb[0].mxu0
    %144 = vmatprep.mubr.f32.mxu0 0.0
    %145 = vmatmul.mubr.f32.gmra.mrb[0].mxu0 %v63
    %v146 = vpop.f32.mrb[0].mxu0
    %v147 = vadd.f32 %v46, %v146
    %v148 = vpop.f32.mrb[0].mxu0
    %149 = vmatprep.mubr.f32.mxu0 0.0
    %150 = vmatmul.mubr.f32.gmra.mrb[0].mxu0 %v66
    %v151 = vpop.f32.mrb[0].mxu0
    %v152 = vadd.f32 %v51, %v151
    %v153 = vpop.f32.mrb[0].mxu0
    %154 = vmatprep.mubr.f32.mxu0 0.0
    %155 = vmatmul.mubr.f32.gmra.mrb[0].mxu0 %v69
    %v156 = vpop.f32.mrb[0].mxu0
    %v157 = vadd.f32 %v56, %v156
    %v158 = vpop.f32.mrb[0].mxu0
    %159 = vdwg.mxu0
    %v160 = vmax.f32 %v142, 0.0
    %v161 = vmax.f32 %v147, 0.0
    %v162 = vmax.f32 %v152, 0.0
    %v163 = vmax.f32 %v157, 0.0
    %v164 = vld [vmem:[%s3] sm:$0xff]
    %v165 = vld [vmem:[%s3 + $0x8] sm:$0xff]
    %v166 = vld [vmem:[%s3 + $0x10] sm:$0xff]
    %v167 = vld [vmem:[%s3 + $0x18] sm:$0xff]
    %v168 = vld [vmem:[%s4] sm:$0xff]
    %v169 = vld [vmem:[%s4 + $0x8] sm:$0xff]
    %v170 = vld [vmem:[%s4 + $0x10] sm:$0xff]
    %v171 = vld [vmem:[%s4 + $0x18] sm:$0xff]
    %173 = vset.pattern.permute.xlu0 0
    %174 = vperm.xlu0 %173, %v168
    %v175 = vpop.permute.xlu0 %174
    %178 = vset.pattern.permute.xlu0 0
    %179 = vperm.xlu0 %178, %v169
    %v180 = vpop.permute.xlu0 %179
    %183 = vset.pattern.permute.xlu0 0
    %184 = vperm.xlu0 %183, %v170
    %v185 = vpop.permute.xlu0 %184
    %188 = vset.pattern.permute.xlu0 0
    %189 = vperm.xlu0 %188, %v171
    %v190 = vpop.permute.xlu0 %189
    %vm192 = vcmask 261120
    %v194 = vsel %vm192, %v164, 0
    %v197 = vsel %vm192, %v165, 0
    %v200 = vsel %vm192, %v166, 0
    %v203 = vsel %vm192, %v167, 0
    %205 = vmatprep.subr.mxu0 0.0
    %206 = vmatpush1.msra.mxu0 %v160
    %207 = vmatprep.subr.mxu0 0.0
    %208 = vmatpush1.msra.mxu0 %v161
    %209 = vmatprep.subr.mxu0 0.0
    %210 = vmatpush1.msra.mxu0 %v162
    %211 = vmatprep.subr.mxu0 0.0
    %212 = vmatpush1.msra.mxu0 %v163
    %213 = vmatprep.subr.mxu0 0.0
    %214 = vmatpush1.msra.mxu0 0.0
    %215 = vmatprep.subr.mxu0 0.0
    %216 = vmatpush1.msra.mxu0 0.0
    %217 = vmatprep.subr.mxu0 0.0
    %218 = vmatpush1.msra.mxu0 0.0
    %219 = vmatprep.subr.mxu0 0.0
    %220 = vmatpush1.msra.mxu0 0.0
    %221 = vmatprep.subr.mxu0 0.0
    %222 = vmatpush1.msra.mxu0 0.0
    %223 = vmatprep.subr.mxu0 0.0
    %224 = vmatpush1.msra.mxu0 0.0
    %225 = vmatprep.subr.mxu0 0.0
    %226 = vmatpush1.msra.mxu0 0.0
    %227 = vmatprep.subr.mxu0 0.0
    %228 = vmatpush1.msra.mxu0 0.0
    %229 = vmatprep.subr.mxu0 0.0
    %230 = vmatpush1.msra.mxu0 0.0
    %231 = vmatprep.subr.mxu0 0.0
    %232 = vmatpush1.msra.mxu0 0.0
    %233 = vmatprep.subr.mxu0 0.0
    %234 = vmatpush1.msra.mxu0 0.0
    %235 = vmatprep.subr.mxu0 0.0
    %236 = vmatpush1.msra.mxu0 0.0
    %237 = vmatprep.subr.mxu0 0.0
    %238 = vmatpush1.msra.mxu0 0.0
    %239 = vmatprep.subr.mxu0 0.0
    %240 = vmatpush1.msra.mxu0 0.0
    %241 = vmatprep.subr.mxu0 0.0
    %242 = vmatpush1.msra.mxu0 0.0
    %243 = vmatprep.subr.mxu0 0.0
    %244 = vmatpush1.msra.mxu0 0.0
    %245 = vmatprep.subr.mxu0 0.0
    %246 = vmatpush1.msra.mxu0 0.0
    %247 = vmatprep.subr.mxu0 0.0
    %248 = vmatpush1.msra.mxu0 0.0
    %249 = vmatprep.subr.mxu0 0.0
    %250 = vmatpush1.msra.mxu0 0.0
    %251 = vmatprep.subr.mxu0 0.0
    %252 = vmatpush1.msra.mxu0 0.0
    %253 = vmatprep.subr.mxu0 0.0
    %254 = vmatpush1.msra.mxu0 0.0
    %255 = vmatprep.subr.mxu0 0.0
    %256 = vmatpush1.msra.mxu0 0.0
    %257 = vmatprep.subr.mxu0 0.0
    %258 = vmatpush1.msra.mxu0 0.0
    %259 = vmatprep.subr.mxu0 0.0
    %260 = vmatpush1.msra.mxu0 0.0
    %261 = vmatprep.subr.mxu0 0.0
    %262 = vmatpush1.msra.mxu0 0.0
    %263 = vmatprep.subr.mxu0 0.0
    %264 = vmatpush1.msra.mxu0 0.0
    %265 = vmatprep.subr.mxu0 0.0
    %266 = vmatpush1.msra.mxu0 0.0
    %267 = vmatprep.subr.mxu0 0.0
    %268 = vmatpush1.msra.mxu0 0.0
    %269 = vmatprep.mubr.f32.mxu0 0.0
    %270 = vmatmul.mubr.f32.gmra.mrb[0].mxu0 %v194
    %v271 = vpop.f32.mrb[0].mxu0
    %v272 = vadd.f32 %v175, %v271
    %v273 = vpop.f32.mrb[0].mxu0
    %274 = vmatprep.mubr.f32.mxu0 0.0
    %275 = vmatmul.mubr.f32.gmra.mrb[0].mxu0 %v197
    %v276 = vpop.f32.mrb[0].mxu0
    %v277 = vadd.f32 %v180, %v276
    %v278 = vpop.f32.mrb[0].mxu0
    %279 = vmatprep.mubr.f32.mxu0 0.0
    %280 = vmatmul.mubr.f32.gmra.mrb[0].mxu0 %v200
    %v281 = vpop.f32.mrb[0].mxu0
    %v282 = vadd.f32 %v185, %v281
    %v283 = vpop.f32.mrb[0].mxu0
    %284 = vmatprep.mubr.f32.mxu0 0.0
    %285 = vmatmul.mubr.f32.gmra.mrb[0].mxu0 %v203
    %v286 = vpop.f32.mrb[0].mxu0
    %v287 = vadd.f32 %v190, %v286
    %v288 = vpop.f32.mrb[0].mxu0
    %289 = vdwg.mxu0
    %v290 = vmax.f32 %v272, 0.0
    %v291 = vmax.f32 %v277, 0.0
    %v292 = vmax.f32 %v282, 0.0
    %v293 = vmax.f32 %v287, 0.0
    %v294 = vld [vmem:[%s5] sm:$0x1]
    %v295 = vld [vmem:[#allocation2] sm:$0x1]
    %297 = vset.pattern.permute.xlu0 0
    %298 = vperm.xlu0 %297, %v295
    %v299 = vpop.permute.xlu0 %298
    %v301 = vlaneseq
    %v302 = vshrl.u32 %v301, 7
    %v303 = vsub.s32 0, %v302
    %v304 = vrot.slane %v299, %v303
    %v306 = vsel %vm192, %v294, 0
    %308 = vmatprep.subr.mxu0 0.0
    %309 = vmatpush1.msra.mxu0 %v290
    %310 = vmatprep.subr.mxu0 0.0
    %311 = vmatpush1.msra.mxu0 %v291
    %312 = vmatprep.subr.mxu0 0.0
    %313 = vmatpush1.msra.mxu0 %v292
    %314 = vmatprep.subr.mxu0 0.0
    %315 = vmatpush1.msra.mxu0 %v293
    %316 = vmatprep.subr.mxu0 0.0
    %317 = vmatpush1.msra.mxu0 0.0
    %318 = vmatprep.subr.mxu0 0.0
    %319 = vmatpush1.msra.mxu0 0.0
    %320 = vmatprep.subr.mxu0 0.0
    %321 = vmatpush1.msra.mxu0 0.0
    %322 = vmatprep.subr.mxu0 0.0
    %323 = vmatpush1.msra.mxu0 0.0
    %324 = vmatprep.subr.mxu0 0.0
    %325 = vmatpush1.msra.mxu0 0.0
    %326 = vmatprep.subr.mxu0 0.0
    %327 = vmatpush1.msra.mxu0 0.0
    %328 = vmatprep.subr.mxu0 0.0
    %329 = vmatpush1.msra.mxu0 0.0
    %330 = vmatprep.subr.mxu0 0.0
    %331 = vmatpush1.msra.mxu0 0.0
    %332 = vmatprep.subr.mxu0 0.0
    %333 = vmatpush1.msra.mxu0 0.0
    %334 = vmatprep.subr.mxu0 0.0
    %335 = vmatpush1.msra.mxu0 0.0
    %336 = vmatprep.subr.mxu0 0.0
    %337 = vmatpush1.msra.mxu0 0.0
    %338 = vmatprep.subr.mxu0 0.0
    %339 = vmatpush1.msra.mxu0 0.0
    %340 = vmatprep.subr.mxu0 0.0
    %341 = vmatpush1.msra.mxu0 0.0
    %342 = vmatprep.subr.mxu0 0.0
    %343 = vmatpush1.msra.mxu0 0.0
    %344 = vmatprep.subr.mxu0 0.0
    %345 = vmatpush1.msra.mxu0 0.0
    %346 = vmatprep.subr.mxu0 0.0
    %347 = vmatpush1.msra.mxu0 0.0
    %348 = vmatprep.subr.mxu0 0.0
    %349 = vmatpush1.msra.mxu0 0.0
    %350 = vmatprep.subr.mxu0 0.0
    %351 = vmatpush1.msra.mxu0 0.0
    %352 = vmatprep.subr.mxu0 0.0
    %353 = vmatpush1.msra.mxu0 0.0
    %354 = vmatprep.subr.mxu0 0.0
    %355 = vmatpush1.msra.mxu0 0.0
    %356 = vmatprep.subr.mxu0 0.0
    %357 = vmatpush1.msra.mxu0 0.0
    %358 = vmatprep.subr.mxu0 0.0
    %359 = vmatpush1.msra.mxu0 0.0
    %360 = vmatprep.subr.mxu0 0.0
    %361 = vmatpush1.msra.mxu0 0.0
    %362 = vmatprep.subr.mxu0 0.0
    %363 = vmatpush1.msra.mxu0 0.0
    %364 = vmatprep.subr.mxu0 0.0
    %365 = vmatpush1.msra.mxu0 0.0
    %366 = vmatprep.subr.mxu0 0.0
    %367 = vmatpush1.msra.mxu0 0.0
    %368 = vmatprep.subr.mxu0 0.0
    %369 = vmatpush1.msra.mxu0 0.0
    %370 = vmatprep.subr.mxu0 0.0
    %371 = vmatpush1.msra.mxu0 0.0
    %372 = vmatprep.mubr.f32.mxu0 0.0
    %373 = vmatmul.mubr.f32.gmra.mrb[0].mxu0 %v306
    %v374 = vpop.f32.mrb[0].mxu0
    %v375 = vadd.f32 %v304, %v374
    %v376 = vpop.f32.mrb[0].mxu0
    %377 = vdwg.mxu0
    %378 = vst [vmem:[#allocation3] sm:$0x1] %v375
    // Predicated region
    $region30: #{tpu_custom_call.1} parent=1 // pred_check
      _
    $region31: #{tpu_custom_call.1} parent=1 // pred_check_branch
      %380 = sbr.rel (0) target = $region33
    $region32: #{tpu_custom_call.1} parent=1 // pred_region
      %s382 = ssub.s32 16, 16
      %383 = vsyncadd [#allocation4], %s382
      %s385 = sshll.u32 [#allocation3], 4
      %s386 = int_to_ptr.vmem [resolvable:$true] %s385
      %388 = dma.vmem_to_hbm [thread:$0]  %s386, 16, %s7, [#allocation4]
    $region33: #{tpu_custom_call.1} parent=1 // pred_fallthru
      _
    // Predicated region
    $region34: #{tpu_custom_call.1} parent=1 // pred_check
      _
    $region35: #{tpu_custom_call.1} parent=1 // pred_check_branch
      %390 = sbr.rel (0) target = $region37
    $region36: #{tpu_custom_call.1} parent=1 // pred_region
      %391 = dma.done [#allocation4], 16
    $region37: #{tpu_custom_call.1} parent=1 // pred_fallthru
      _
    %392 = vsyncpa [#allocation4], 1

</llo_original>
